<compile_context>
chip_gen: v7x
topology: tpu7x:2x2x1
jax: 0.10.0
libtpu: 0.0.40
codegen_flags: <defaults>
</compile_context>

<pallas_src>
import jax
import jax.numpy as jnp
from jax.experimental import pallas as pl
from jax.experimental.pallas import tpu as pltpu

INPUT_SIZE = 10
HIDDEN_SIZE = 20
OUTPUT_SIZE = 5

LANE = 128  # TPU lane width


def _round_up(x, m):
    return (x + m - 1) // m * m


def mlp_kernel(x_ref, w1_ref, b1_ref, w2_ref, b2_ref, o_ref):
    # x_ref:  (TM, in_f)      caller dtype (f32 here)
    # w1_ref: (in_f, hid_p)   bf16, resident
    # b1_ref: (1, hid_p)      f32
    # w2_ref: (hid_p, out_f)  bf16, resident
    # b2_ref: (1, out_f)      f32
    # o_ref:  (TM, out_f)
    x = x_ref[...].astype(jnp.bfloat16)                     # free VPU cast
    # fc1 (bf16 MXU, f32 accumulate) + bias + ReLU in f32.
    h = jnp.dot(x, w1_ref[...], preferred_element_type=jnp.float32) + b1_ref[...]
    h = jnp.maximum(h, 0.0)
    # fc2 (bf16 MXU, f32 accumulate) + bias in f32.
    y = jnp.dot(h.astype(jnp.bfloat16), w2_ref[...],
                preferred_element_type=jnp.float32) + b2_ref[...]
    o_ref[...] = y.astype(o_ref.dtype)


def prepare_params(w1, b1, w2, b2, param_dtype=jnp.bfloat16):
    """One-time packing: pad hidden dim to a lane multiple, cast weights to bf16.

    Weights are expected pre-transposed to (in_features, out_features) layout
    (i.e. torch `linear.weight.T`). Zero padding keeps the math exact: padded
    hidden columns of w1 get zero weight + zero bias (ReLU(0)=0) and multiply
    the zero-padded rows of w2.
    """
    hid = w1.shape[1]
    hid_p = _round_up(hid, LANE)
    w1_p = jnp.pad(w1, ((0, 0), (0, hid_p - hid))).astype(param_dtype)
    b1_p = jnp.pad(b1, (0, hid_p - hid)).reshape(1, hid_p).astype(jnp.float32)
    w2_p = jnp.pad(w2, ((0, hid_p - hid), (0, 0))).astype(param_dtype)
    b2_p = b2.reshape(1, -1).astype(jnp.float32)
    return w1_p, b1_p, w2_p, b2_p


@jax.jit
def dummy_model_forward(x, w1_p, b1_p, w2_p, b2_p):
    """relu(x @ w1 + b1) @ w2 + b2, with pre-padded / pre-cast params."""
    B, in_f = x.shape
    hid_p = w1_p.shape[1]
    out_f = w2_p.shape[1]
    dtype = x.dtype

    # Pad batch only to a sublane multiple (8); per-feature padding removed.
    B_pad = _round_up(B, 8)
    if B_pad != B:
        x = jnp.pad(x, ((0, B_pad - B), (0, 0)))

    # Large batch tile (step overhead >> DMA cost here); aim for >= 2 grid
    # steps so both v7x TensorCores get work, capped at 2048 rows.
    TM = min(2048, _round_up(pl.cdiv(B_pad, 2), 8))
    grid = (pl.cdiv(B_pad, TM),)

    y = pl.pallas_call(
        mlp_kernel,
        out_shape=jax.ShapeDtypeStruct((B_pad, out_f), dtype),
        grid_spec=pl.GridSpec(
            grid=grid,
            in_specs=[
                pl.BlockSpec((TM, in_f), lambda i: (i, 0)),      # x: batch-tiled
                pl.BlockSpec((in_f, hid_p), lambda i: (0, 0)),   # w1: resident
                pl.BlockSpec((1, hid_p), lambda i: (0, 0)),      # b1: resident
                pl.BlockSpec((hid_p, out_f), lambda i: (0, 0)),  # w2: resident
                pl.BlockSpec((1, out_f), lambda i: (0, 0)),      # b2: resident
            ],
            out_specs=pl.BlockSpec((TM, out_f), lambda i: (i, 0)),
        ),
        compiler_params=pltpu.CompilerParams(
            dimension_semantics=("parallel",),  # independent batch tiles
        ),
    )(x, w1_p, b1_p, w2_p, b2_p)

    # Static no-op when B is already a multiple of 8 (no extra HBM pass).
    return y if B_pad == B else y[:B]


if __name__ == "__main__":
    key = jax.random.PRNGKey(0)
    kx, k1, k2, k3, k4 = jax.random.split(key, 5)

    batch = 8
    # Deterministic params, built directly in the transposed
    # (in_features, out_features) layout used by the kernel.
    x = jax.random.normal(kx, (batch, INPUT_SIZE), dtype=jnp.float32)
    w1 = jax.random.normal(k1, (INPUT_SIZE, HIDDEN_SIZE), dtype=jnp.float32) * 0.1
    b1 = jax.random.normal(k2, (HIDDEN_SIZE,), dtype=jnp.float32) * 0.1
    w2 = jax.random.normal(k3, (HIDDEN_SIZE, OUTPUT_SIZE), dtype=jnp.float32) * 0.1
    b2 = jax.random.normal(k4, (OUTPUT_SIZE,), dtype=jnp.float32) * 0.1

    # One-time param packing (outside the per-call forward path).
    params = prepare_params(w1, b1, w2, b2)
    params = jax.block_until_ready(params)

    out = dummy_model_forward(x, *params)
    out = jax.block_until_ready(out)

    # Reference check against plain-JAX f32 forward. Tolerance loosened because
    # weights/activations stream to the MXU in bf16 (f32 accumulate).
    ref = jnp.maximum(x @ w1 + b1, 0.0) @ w2 + b2
    assert out.shape == (batch, OUTPUT_SIZE)
    assert jnp.allclose(out, ref, atol=3e-2, rtol=3e-2)

    print("KERNEL_OK")
</pallas_src>

<mosaic_0001>
module attributes {stable_mosaic.version = 11 : i64} {
  func.func @mlp_kernel(%arg0: i32, %arg1: memref<8x10xf32, #tpu.memory_space<vmem>>, %arg2: memref<10x128xbf16, #tpu.memory_space<vmem>>, %arg3: memref<1x128xf32, #tpu.memory_space<vmem>>, %arg4: memref<128x5xbf16, #tpu.memory_space<vmem>>, %arg5: memref<1x5xf32, #tpu.memory_space<vmem>>, %arg6: memref<8x5xf32, #tpu.memory_space<vmem>>) attributes {dimension_semantics = [#tpu.dimension_semantics<parallel>], iteration_bounds = array<i64: 1>, scalar_prefetch = 0 : i64, scratch_operands = 0 : i64, tpu.core_type = #tpu.core_type<tc>, window_params = [{transform_indices = @transform_0, window_bounds = array<i64: 8, 10>}, {pipeline_mode = #tpu.pipeline_mode<synchronous>, transform_indices = @transform_1, window_bounds = array<i64: 10, 128>}, {pipeline_mode = #tpu.pipeline_mode<synchronous>, transform_indices = @transform_2, window_bounds = array<i64: 1, 128>}, {pipeline_mode = #tpu.pipeline_mode<synchronous>, transform_indices = @transform_3, window_bounds = array<i64: 128, 5>}, {pipeline_mode = #tpu.pipeline_mode<synchronous>, transform_indices = @transform_4, window_bounds = array<i64: 1, 5>}, {transform_indices = @transform_5, window_bounds = array<i64: 8, 5>}]} {
    %c0 = arith.constant 0 : index
    %c0_0 = arith.constant 0 : index
    %0 = vector.load %arg1[%c0, %c0_0] : memref<8x10xf32, #tpu.memory_space<vmem>>, vector<8x10xf32>
    %1 = arith.truncf %0 : vector<8x10xf32> to vector<8x10xbf16>
    %c0_1 = arith.constant 0 : index
    %c0_2 = arith.constant 0 : index
    %2 = vector.load %arg2[%c0_1, %c0_2] : memref<10x128xbf16, #tpu.memory_space<vmem>>, vector<10x128xbf16>
    %cst = arith.constant dense<0.000000e+00> : vector<8x128xf32>
    %3 = tpu.matmul %1, %2, %cst {dimension_numbers = #tpu.dot_dimension_numbers<[1], [0], [0], [1], [0, 0, 1, 1], [], []>} : vector<8x10xbf16>, vector<10x128xbf16>, vector<8x128xf32> -> vector<8x128xf32>
    %c0_3 = arith.constant 0 : index
    %c0_4 = arith.constant 0 : index
    %4 = vector.load %arg3[%c0_3, %c0_4] : memref<1x128xf32, #tpu.memory_space<vmem>>, vector<1x128xf32>
    %5 = vector.broadcast %4 : vector<1x128xf32> to vector<8x128xf32>
    %6 = arith.addf %3, %5 : vector<8x128xf32>
    %cst_5 = arith.constant 0.000000e+00 : f32
    %7 = vector.broadcast %cst_5 : f32 to vector<8x128xf32>
    %8 = arith.maximumf %6, %7 : vector<8x128xf32>
    %9 = arith.truncf %8 : vector<8x128xf32> to vector<8x128xbf16>
    %c0_6 = arith.constant 0 : index
    %c0_7 = arith.constant 0 : index
    %10 = vector.load %arg4[%c0_6, %c0_7] : memref<128x5xbf16, #tpu.memory_space<vmem>>, vector<128x5xbf16>
    %cst_8 = arith.constant dense<0.000000e+00> : vector<8x5xf32>
    %11 = tpu.matmul %9, %10, %cst_8 {dimension_numbers = #tpu.dot_dimension_numbers<[1], [0], [0], [1], [0, 0, 1, 1], [], []>} : vector<8x128xbf16>, vector<128x5xbf16>, vector<8x5xf32> -> vector<8x5xf32>
    %c0_9 = arith.constant 0 : index
    %c0_10 = arith.constant 0 : index
    %12 = vector.load %arg5[%c0_9, %c0_10] : memref<1x5xf32, #tpu.memory_space<vmem>>, vector<1x5xf32>
    %13 = vector.broadcast %12 : vector<1x5xf32> to vector<8x5xf32>
    %14 = arith.addf %11, %13 : vector<8x5xf32>
    %c0_11 = arith.constant 0 : index
    %c0_12 = arith.constant 0 : index
    %15 = vector.load %arg6[%c0_11, %c0_12] : memref<8x5xf32, #tpu.memory_space<vmem>>, vector<8x5xf32>
    tpu.vector_store %arg6[%c0_11, %c0_12], %14 {strides = array<i32>} : memref<8x5xf32, #tpu.memory_space<vmem>>, vector<8x5xf32>,
    return
  }
  func.func @transform_0(%arg0: i32) -> (i32, i32) {
    %c0_i32 = arith.constant 0 : i32
    %c0_i32_0 = arith.constant 0 : i32
    return %arg0, %c0_i32 : i32, i32
  }
  func.func @transform_1(%arg0: i32) -> (i32, i32) {
    %c0_i32 = arith.constant 0 : i32
    %c0_i32_0 = arith.constant 0 : i32
    %c0_i32_1 = arith.constant 0 : i32
    return %c0_i32, %c0_i32_0 : i32, i32
  }
  func.func @transform_2(%arg0: i32) -> (i32, i32) {
    %c0_i32 = arith.constant 0 : i32
    %c0_i32_0 = arith.constant 0 : i32
    %c0_i32_1 = arith.constant 0 : i32
    return %c0_i32, %c0_i32_0 : i32, i32
  }
  func.func @transform_3(%arg0: i32) -> (i32, i32) {
    %c0_i32 = arith.constant 0 : i32
    %c0_i32_0 = arith.constant 0 : i32
    %c0_i32_1 = arith.constant 0 : i32
    return %c0_i32, %c0_i32_0 : i32, i32
  }
  func.func @transform_4(%arg0: i32) -> (i32, i32) {
    %c0_i32 = arith.constant 0 : i32
    %c0_i32_0 = arith.constant 0 : i32
    %c0_i32_1 = arith.constant 0 : i32
    return %c0_i32, %c0_i32_0 : i32, i32
  }
  func.func @transform_5(%arg0: i32) -> (i32, i32) {
    %c0_i32 = arith.constant 0 : i32
    %c0_i32_0 = arith.constant 0 : i32
    return %arg0, %c0_i32 : i32, i32
  }
}

</mosaic_0001>

<llo_original>
// kernel: dummy_model_forward.1
$region0: #{dummy_model_forward.1}
  #allocation0 [shape = 'u32[]', space=smem, size = 0x4, offset = 0x4, fixed_abs, tag = 'smem constant byte address 0x4 - core index']
  #allocation1 [shape = 'u32[144,128]{1,0:T(1,128)}', space=vmem, size = 0x12000, scoped, tag = 'internal scratch']
  %s0 = inlined_call_operand.vmem [shape: f32[8,10], index: 0, kind: input, shape index: {}]
  %s1 = inlined_call_operand.vmem [shape: bf16[10,128], index: 1, kind: input, shape index: {}]
  %s2 = inlined_call_operand.vmem [shape: f32[1,128], index: 2, kind: input, shape index: {}]
  %s3 = inlined_call_operand.vmem [shape: bf16[128,5], index: 3, kind: input, shape index: {}]
  %s4 = inlined_call_operand.vmem [shape: f32[1,5], index: 4, kind: input, shape index: {}]
  %s5 = inlined_call_operand.hbm [shape: f32[8,5], index: 5, kind: output, shape index: {}]
  %s6 = sld [smem:[#allocation0]]
  $region30: #{dummy_model_forward.1} parent=0
    _
  %s8 = ssub.s32 1, %s6
  %s9 = scalar_select 0, %s8, %s6
  $region1: #{dummy_model_forward.1} parent=0
    #allocation2 [shape = 'u8[4096]{0}', space=vmem, size = 0x1000, scoped, tag = 'output window, operand 0, single buffered']
    #allocation3 [shape = 's32[1]{0}', space=sflag, size = 0x4, scoped, tag = 'scoped memory for dummy_model_forward.1']
    %10 = vsyncpa [#allocation3], 0
    // Predicated region
    $region2: #{dummy_model_forward.1} parent=1 // pred_check
      _
    $region3: #{dummy_model_forward.1} parent=1 // pred_check_branch
      %12 = sbr.rel (0) target = $region5
    $region4: #{dummy_model_forward.1} parent=1 // pred_region
      _
    $region5: #{dummy_model_forward.1} parent=1 // pred_fallthru
      _
    // Predicated region
    $region6: #{dummy_model_forward.1} parent=1 // pred_check
      _
    $region7: #{dummy_model_forward.1} parent=1 // pred_check_branch
      %14 = sbr.rel (0) target = $region9
    $region8: #{dummy_model_forward.1} parent=1 // pred_region
      _
    $region9: #{dummy_model_forward.1} parent=1 // pred_fallthru
      _
    // Predicated region
    $region10: #{dummy_model_forward.1} parent=1 // pred_check
      _
    $region11: #{dummy_model_forward.1} parent=1 // pred_check_branch
      %16 = sbr.rel (0) target = $region13
    $region12: #{dummy_model_forward.1} parent=1 // pred_region
      _
    $region13: #{dummy_model_forward.1} parent=1 // pred_fallthru
      _
    // Predicated region
    $region14: #{dummy_model_forward.1} parent=1 // pred_check
      _
    $region15: #{dummy_model_forward.1} parent=1 // pred_check_branch
      %18 = sbr.rel (0) target = $region17
    $region16: #{dummy_model_forward.1} parent=1 // pred_region
      _
    $region17: #{dummy_model_forward.1} parent=1 // pred_fallthru
      _
    // Predicated region
    $region18: #{dummy_model_forward.1} parent=1 // pred_check
      _
    $region19: #{dummy_model_forward.1} parent=1 // pred_check_branch
      %20 = sbr.rel (0) target = $region21
    $region20: #{dummy_model_forward.1} parent=1 // pred_region
      _
    $region21: #{dummy_model_forward.1} parent=1 // pred_fallthru
      _
    %v22 = vld [vmem:[%s0] sm:$0xff]
    %v23 = vpack.c.bf16 %v22, %v22
    %v24 = vld [vmem:[%s1] sm:$0xf]
    %v25 = vld [vmem:[%s1 + $0x4] sm:$0x1]
    %v26 = vld [vmem:[%s2] sm:$0x1]
    %v28 = vlaneseq
    %v29 = vshrl.u32 %v28, 7
    %v30 = vsub.s32 0, %v29
    %v31 = vrot.slane %v26, %v30
    %v35 = vunpack.c.l.b16 %v24
    %v36 = vunpack.c.l.b16 %v25
    %v37 = vpack.c.b16 %v36, %v35
    %vm38 = vcmask 80896
    %v40 = vsel %vm38, %v23, 0
    %vm42 = vcmask 1044480
    %v44 = vsel %vm42, %v37, 0
    %46 = vmatprep.subr.bf16.mxu0 0
    %47 = vmatpush1.bf16.msra.mxu0 %v44
    %48 = vmatprep.subr.bf16.mxu0 0
    %49 = vmatpush1.bf16.msra.mxu0 0
    %50 = vmatprep.subr.bf16.mxu0 0
    %51 = vmatpush1.bf16.msra.mxu0 0
    %52 = vmatprep.subr.bf16.mxu0 0
    %53 = vmatpush1.bf16.msra.mxu0 0
    %54 = vmatprep.subr.bf16.mxu0 0
    %55 = vmatpush1.bf16.msra.mxu0 0
    %56 = vmatprep.subr.bf16.mxu0 0
    %57 = vmatpush1.bf16.msra.mxu0 0
    %58 = vmatprep.subr.bf16.mxu0 0
    %59 = vmatpush1.bf16.msra.mxu0 0
    %60 = vmatprep.subr.bf16.mxu0 0
    %61 = vmatpush1.bf16.msra.mxu0 0
    %62 = vmatprep.subr.bf16.mxu0 0
    %63 = vmatpush1.bf16.msra.mxu0 0
    %64 = vmatprep.subr.bf16.mxu0 0
    %65 = vmatpush1.bf16.msra.mxu0 0
    %66 = vmatprep.subr.bf16.mxu0 0
    %67 = vmatpush1.bf16.msra.mxu0 0
    %68 = vmatprep.subr.bf16.mxu0 0
    %69 = vmatpush1.bf16.msra.mxu0 0
    %70 = vmatprep.subr.bf16.mxu0 0
    %71 = vmatpush1.bf16.msra.mxu0 0
    %72 = vmatprep.subr.bf16.mxu0 0
    %73 = vmatpush1.bf16.msra.mxu0 0
    %74 = vmatprep.subr.bf16.mxu0 0
    %75 = vmatpush1.bf16.msra.mxu0 0
    %76 = vmatprep.subr.bf16.mxu0 0
    %77 = vmatpush1.bf16.msra.mxu0 0
    %78 = vmatprep.mubr.bf16.mxu0 0
    %79 = vmatmul.mubr.bf16.gmra.mrb[0].mxu0 %v40
    %v80 = vpop.f32.mrb[0].mxu0
    %v81 = vadd.f32 %v31, %v80
    %v82 = vpop.f32.mrb[0].mxu0
    %v83 = vpop.f32.mrb[0].mxu0
    %v84 = vpop.f32.mrb[0].mxu0
    %85 = vdwg.mxu0
    %v86 = vmax.f32 %v81, 0.0
    %v87 = vpack.c.bf16 %v86, %v86
    %v88 = vld [vmem:[%s3] sm:$0xf]
    %v89 = vld [vmem:[%s3 + $0x4] sm:$0xf]
    %v90 = vld [vmem:[%s3 + $0x8] sm:$0xf]
    %v91 = vld [vmem:[%s3 + $0xc] sm:$0xf]
    %v92 = vld [vmem:[%s3 + $0x10] sm:$0xf]
    %v93 = vld [vmem:[%s3 + $0x14] sm:$0xf]
    %v94 = vld [vmem:[%s3 + $0x18] sm:$0xf]
    %v95 = vld [vmem:[%s3 + $0x1c] sm:$0xf]
    %v96 = vld [vmem:[%s3 + $0x20] sm:$0xf]
    %v97 = vld [vmem:[%s3 + $0x24] sm:$0xf]
    %v98 = vld [vmem:[%s3 + $0x28] sm:$0xf]
    %v99 = vld [vmem:[%s3 + $0x2c] sm:$0xf]
    %v100 = vld [vmem:[%s3 + $0x30] sm:$0xf]
    %v101 = vld [vmem:[%s3 + $0x34] sm:$0xf]
    %v102 = vld [vmem:[%s3 + $0x38] sm:$0xf]
    %v103 = vld [vmem:[%s3 + $0x3c] sm:$0xf]
    %v104 = vld [vmem:[%s4] sm:$0x1]
    %v106 = vlaneseq
    %v107 = vshrl.u32 %v106, 7
    %v108 = vsub.s32 0, %v107
    %v109 = vrot.slane %v104, %v108
    %v127 = vunpack.c.l.b16 %v88
    %v128 = vunpack.c.l.b16 %v89
    %v129 = vunpack.c.l.b16 %v90
    %v130 = vunpack.c.l.b16 %v91
    %v131 = vunpack.c.l.b16 %v92
    %v132 = vunpack.c.l.b16 %v93
    %v133 = vunpack.c.l.b16 %v94
    %v134 = vunpack.c.l.b16 %v95
    %v135 = vunpack.c.l.b16 %v96
    %v136 = vunpack.c.l.b16 %v97
    %v137 = vunpack.c.l.b16 %v98
    %v138 = vunpack.c.l.b16 %v99
    %v139 = vunpack.c.l.b16 %v100
    %v140 = vunpack.c.l.b16 %v101
    %v141 = vunpack.c.l.b16 %v102
    %v142 = vunpack.c.l.b16 %v103
    %v143 = vpack.c.b16 %v128, %v127
    %v144 = vpack.c.b16 %v130, %v129
    %v145 = vpack.c.b16 %v132, %v131
    %v146 = vpack.c.b16 %v134, %v133
    %v147 = vpack.c.b16 %v136, %v135
    %v148 = vpack.c.b16 %v138, %v137
    %v149 = vpack.c.b16 %v140, %v139
    %v150 = vpack.c.b16 %v142, %v141
    %159 = vmatprep.subr.bf16.mxu0 0
    %160 = vmatpush1.bf16.msra.mxu0 %v143
    %161 = vmatprep.subr.bf16.mxu0 0
    %162 = vmatpush1.bf16.msra.mxu0 %v144
    %163 = vmatprep.subr.bf16.mxu0 0
    %164 = vmatpush1.bf16.msra.mxu0 %v145
    %165 = vmatprep.subr.bf16.mxu0 0
    %166 = vmatpush1.bf16.msra.mxu0 %v146
    %167 = vmatprep.subr.bf16.mxu0 0
    %168 = vmatpush1.bf16.msra.mxu0 %v147
    %169 = vmatprep.subr.bf16.mxu0 0
    %170 = vmatpush1.bf16.msra.mxu0 %v148
    %171 = vmatprep.subr.bf16.mxu0 0
    %172 = vmatpush1.bf16.msra.mxu0 %v149
    %173 = vmatprep.subr.bf16.mxu0 0
    %174 = vmatpush1.bf16.msra.mxu0 %v150
    %175 = vmatprep.subr.bf16.mxu0 0
    %176 = vmatpush1.bf16.msra.mxu0 0
    %177 = vmatprep.subr.bf16.mxu0 0
    %178 = vmatpush1.bf16.msra.mxu0 0
    %179 = vmatprep.subr.bf16.mxu0 0
    %180 = vmatpush1.bf16.msra.mxu0 0
    %181 = vmatprep.subr.bf16.mxu0 0
    %182 = vmatpush1.bf16.msra.mxu0 0
    %183 = vmatprep.subr.bf16.mxu0 0
    %184 = vmatpush1.bf16.msra.mxu0 0
    %185 = vmatprep.subr.bf16.mxu0 0
    %186 = vmatpush1.bf16.msra.mxu0 0
    %187 = vmatprep.subr.bf16.mxu0 0
    %188 = vmatpush1.bf16.msra.mxu0 0
    %189 = vmatprep.subr.bf16.mxu0 0
    %190 = vmatpush1.bf16.msra.mxu0 0
    %191 = vmatprep.mubr.bf16.mxu0 0
    %192 = vmatmul.mubr.bf16.gmra.mrb[0].mxu0 %v87
    %v193 = vpop.f32.mrb[0].mxu0
    %v194 = vadd.f32 %v109, %v193
    %v195 = vpop.f32.mrb[0].mxu0
    %v196 = vpop.f32.mrb[0].mxu0
    %v197 = vpop.f32.mrb[0].mxu0
    %198 = vdwg.mxu0
    %vm199 = vcmask 39936
    %200 = vst.msk [vmem:[#allocation2] sm:$0xff] %vm199, %v194
    // Predicated region
    $region22: #{dummy_model_forward.1} parent=1 // pred_check
      _
    $region23: #{dummy_model_forward.1} parent=1 // pred_check_branch
      %202 = sbr.rel (0) target = $region25
    $region24: #{dummy_model_forward.1} parent=1 // pred_region
      %s204 = ssub.s32 128, 128
      %205 = vsyncadd [#allocation3], %s204
      %s207 = sshll.u32 [#allocation2], 4
      %s208 = int_to_ptr.vmem [resolvable:$true] %s207
      %210 = dma.vmem_to_hbm [thread:$0]  %s208, 128, %s5, [#allocation3]
    $region25: #{dummy_model_forward.1} parent=1 // pred_fallthru
      _
    // Predicated region
    $region26: #{dummy_model_forward.1} parent=1 // pred_check
      _
    $region27: #{dummy_model_forward.1} parent=1 // pred_check_branch
      %212 = sbr.rel (0) target = $region29
    $region28: #{dummy_model_forward.1} parent=1 // pred_region
      %213 = dma.done [#allocation3], 128
    $region29: #{dummy_model_forward.1} parent=1 // pred_fallthru
      _
    %214 = vsyncpa [#allocation3], 1

</llo_original>
